<compile_context>
chip_gen: v7x
topology: tpu7x:2x2x1
jax: 0.10.0
libtpu: 0.0.40
codegen_flags: <defaults>
</compile_context>

<pallas_src>
import functools

import jax
import jax.numpy as jnp
from jax import lax
from jax.experimental import pallas as pl
from jax.experimental.pallas import tpu as pltpu  # noqa: F401  (TPU backend)


def _kto_loss_kernel(
    policy_ref,   # (3, Bpad): [chosen, rejected, kl] log-probs
    ref_ref,      # (3, Bpad): [ref_chosen, ref_rejected, ref_kl] log-probs
    rewards_ref,  # (2, Bpad): [chosen_rewards, rejected_rewards]
    scalars_ref,  # (1, 128):  [loss, kl, 0, ...]
    *,
    beta: float,
    desirable_weight: float,
    undesirable_weight: float,
    bc: int,
    br: int,
    bk: int,
):
    policy = policy_ref[...].astype(jnp.float32)
    ref = ref_ref[...].astype(jnp.float32)
    diff = policy - ref  # (3, Bpad): [chosen_lr, rejected_lr, kl_diff]

    bpad = diff.shape[-1]

    # rewards = beta * logratios (padding lanes are 0 - 0 = 0, harmless).
    rewards_ref[...] = (beta * diff[0:2, :]).astype(rewards_ref.dtype)

    # kl = clamp(mean(kl_logps - ref_kl_logps), min=0).
    # Padding lanes contribute exactly 0 to the sum, so dividing by bk is the
    # true mean over the real examples.  (Single-device all-reduce.)
    kl = jnp.maximum(jnp.sum(diff[2:3, :]) / jnp.float32(bk), 0.0)

    lane = lax.broadcasted_iota(jnp.int32, (1, bpad), 1)
    chosen_lr = diff[0:1, :]
    rejected_lr = diff[1:2, :]

    # 1 - sigmoid(x) == sigmoid(-x): one fewer VALU subtract, EUP does the rest.
    chosen_losses = jax.nn.sigmoid(beta * (kl - chosen_lr))
    rejected_losses = jax.nn.sigmoid(beta * (rejected_lr - kl))

    chosen_sum = jnp.sum(jnp.where(lane < bc, chosen_losses, 0.0))
    rejected_sum = jnp.sum(jnp.where(lane < br, rejected_losses, 0.0))

    # mean(concat(dw * chosen_losses, uw * rejected_losses))
    loss = (
        desirable_weight * chosen_sum + undesirable_weight * rejected_sum
    ) / jnp.float32(bc + br)

    # Pack both scalars into one lane-dense row: [loss, kl, 0, ...].
    slane = lax.broadcasted_iota(jnp.int32, (1, 128), 1)
    scalars_ref[...] = jnp.where(
        slane == 0, loss, jnp.where(slane == 1, kl, 0.0)
    ).astype(jnp.float32)


def kto_loss(
    chosen_logps,
    rejected_logps,
    kl_logps,
    ref_chosen_logps,
    ref_rejected_logps,
    ref_kl_logps,
    *,
    beta: float = 0.1,
    desirable_weight: float = 1.0,
    undesirable_weight: float = 1.0,
):
    """JAX/Pallas equivalent of KTOLoss.forward. All inputs are 1-D (B,)."""
    bc = int(chosen_logps.shape[0])
    br = int(rejected_logps.shape[0])
    bk = int(kl_logps.shape[0])
    assert bc > 0 and br > 0 and bk > 0, (
        "empty chosen/rejected batches handled only in PyTorch branch"
    )

    bpad = max(128, ((max(bc, br, bk) + 127) // 128) * 128)

    in_dtype = jnp.result_type(
        chosen_logps.dtype,
        rejected_logps.dtype,
        kl_logps.dtype,
        ref_chosen_logps.dtype,
        ref_rejected_logps.dtype,
        ref_kl_logps.dtype,
    )

    def pad_row(x):
        x = x.astype(in_dtype)
        return jnp.pad(x, (0, bpad - x.shape[0]))

    policy = jnp.stack(
        [pad_row(chosen_logps), pad_row(rejected_logps), pad_row(kl_logps)]
    )  # (3, bpad)
    ref = jnp.stack(
        [pad_row(ref_chosen_logps), pad_row(ref_rejected_logps), pad_row(ref_kl_logps)]
    )  # (3, bpad)

    kernel = functools.partial(
        _kto_loss_kernel,
        beta=float(beta),
        desirable_weight=float(desirable_weight),
        undesirable_weight=float(undesirable_weight),
        bc=bc,
        br=br,
        bk=bk,
    )

    itemsize = jnp.dtype(in_dtype).itemsize
    cost = pl.CostEstimate(
        flops=12 * bpad,
        transcendentals=2 * bpad,
        bytes_accessed=(3 + 3 + 2) * bpad * itemsize + 128 * 4,
    )

    rewards, scalars = pl.pallas_call(
        kernel,
        grid=(),
        in_specs=[
            pl.BlockSpec((3, bpad), lambda: (0, 0)),
            pl.BlockSpec((3, bpad), lambda: (0, 0)),
        ],
        out_specs=[
            pl.BlockSpec((2, bpad), lambda: (0, 0)),
            pl.BlockSpec((1, 128), lambda: (0, 0)),
        ],
        out_shape=[
            jax.ShapeDtypeStruct((2, bpad), in_dtype),
            jax.ShapeDtypeStruct((1, 128), jnp.float32),
        ],
        cost_estimate=cost,
    )(policy, ref)

    loss = scalars[0, 0]
    kl = scalars[0, 1]
    chosen_rewards = rewards[0, :bc]
    rejected_rewards = rewards[1, :br]
    return loss, chosen_rewards, rejected_rewards, kl


def _reference(
    chosen_logps,
    rejected_logps,
    kl_logps,
    ref_chosen_logps,
    ref_rejected_logps,
    ref_kl_logps,
    beta=0.1,
    desirable_weight=1.0,
    undesirable_weight=1.0,
):
    kl = jnp.maximum(jnp.mean(kl_logps - ref_kl_logps), 0.0)
    chosen_logratios = chosen_logps - ref_chosen_logps
    chosen_losses = 1.0 - jax.nn.sigmoid(beta * (chosen_logratios - kl))
    chosen_rewards = beta * chosen_logratios
    rejected_logratios = rejected_logps - ref_rejected_logps
    rejected_losses = 1.0 - jax.nn.sigmoid(beta * (kl - rejected_logratios))
    rejected_rewards = beta * rejected_logratios
    losses = jnp.mean(
        jnp.concatenate(
            (desirable_weight * chosen_losses, undesirable_weight * rejected_losses), 0
        )
    )
    return losses, chosen_rewards, rejected_rewards, kl


if __name__ == "__main__":
    key = jax.random.PRNGKey(0)
    BC = 8   # chosen batch
    BR = 6   # rejected batch (different size, exercises masking)
    BK = 8   # kl batch
    keys = jax.random.split(key, 6)
    # Log-probs are negative numbers; use small negative values.
    chosen_logps = -jnp.abs(jax.random.normal(keys[0], (BC,), jnp.float32)) * 5.0
    rejected_logps = -jnp.abs(jax.random.normal(keys[1], (BR,), jnp.float32)) * 5.0
    kl_logps = -jnp.abs(jax.random.normal(keys[2], (BK,), jnp.float32)) * 5.0
    ref_chosen_logps = -jnp.abs(jax.random.normal(keys[3], (BC,), jnp.float32)) * 5.0
    ref_rejected_logps = -jnp.abs(jax.random.normal(keys[4], (BR,), jnp.float32)) * 5.0
    ref_kl_logps = -jnp.abs(jax.random.normal(keys[5], (BK,), jnp.float32)) * 5.0

    out = kto_loss(
        chosen_logps,
        rejected_logps,
        kl_logps,
        ref_chosen_logps,
        ref_rejected_logps,
        ref_kl_logps,
        beta=0.1,
        desirable_weight=1.0,
        undesirable_weight=1.0,
    )
    out = jax.block_until_ready(out)

    ref_out = _reference(
        chosen_logps,
        rejected_logps,
        kl_logps,
        ref_chosen_logps,
        ref_rejected_logps,
        ref_kl_logps,
    )

    for a, b in zip(out, ref_out):
        assert a.shape == b.shape, (a.shape, b.shape)
        assert jnp.allclose(a, b, atol=1e-5, rtol=1e-5), (a, b)

    print("KERNEL_OK")
</pallas_src>

<mosaic_0001>
module attributes {stable_mosaic.version = 11 : i64} {
  func.func @_kto_loss_kernel(%arg0: memref<3x128xf32, #tpu.memory_space<vmem>>, %arg1: memref<3x128xf32, #tpu.memory_space<vmem>>, %arg2: memref<2x128xf32, #tpu.memory_space<vmem>>, %arg3: memref<1x128xf32, #tpu.memory_space<vmem>>) attributes {dimension_semantics = [], scalar_prefetch = 0 : i64, scratch_operands = 0 : i64, tpu.core_type = #tpu.core_type<tc>} {
    %c0 = arith.constant 0 : index
    %c0_0 = arith.constant 0 : index
    %0 = vector.load %arg0[%c0, %c0_0] : memref<3x128xf32, #tpu.memory_space<vmem>>, vector<3x128xf32>
    %c0_1 = arith.constant 0 : index
    %c0_2 = arith.constant 0 : index
    %1 = vector.load %arg1[%c0_1, %c0_2] : memref<3x128xf32, #tpu.memory_space<vmem>>, vector<3x128xf32>
    %2 = arith.subf %0, %1 : vector<3x128xf32>
    %3 = vector.extract_strided_slice %2 {offsets = [0, 0], sizes = [2, 128], strides = [1, 1]} : vector<3x128xf32> to vector<2x128xf32>
    %cst = arith.constant 1.000000e-01 : f32
    %4 = vector.broadcast %cst : f32 to vector<2x128xf32>
    %5 = arith.mulf %4, %3 : vector<2x128xf32>
    %c0_3 = arith.constant 0 : index
    %c0_4 = arith.constant 0 : index
    %6 = vector.load %arg2[%c0_3, %c0_4] : memref<2x128xf32, #tpu.memory_space<vmem>>, vector<2x128xf32>
    tpu.vector_store %arg2[%c0_3, %c0_4], %5 {strides = array<i32>} : memref<2x128xf32, #tpu.memory_space<vmem>>, vector<2x128xf32>,
    %7 = vector.extract_strided_slice %2 {offsets = [2, 0], sizes = [1, 128], strides = [1, 1]} : vector<3x128xf32> to vector<1x128xf32>
    %8 = vector.shape_cast %7 : vector<1x128xf32> to vector<1x1x128xf32>
    %cst_5 = arith.constant dense<0.000000e+00> : vector<1xf32>
    %9 = vector.multi_reduction <add>, %8, %cst_5 [1, 2] : vector<1x1x128xf32> to vector<1xf32>
    %10 = vector.shape_cast %9 : vector<1xf32> to vector<1x1x1xf32>
    %11 = vector.extract %10[0, 0, 0] : f32 from vector<1x1x1xf32>
    %cst_6 = arith.constant 8.000000e+00 : f32
    %12 = arith.divf %11, %cst_6 : f32
    %cst_7 = arith.constant 0.000000e+00 : f32
    %13 = arith.maximumf %12, %cst_7 : f32
    %14 = tpu.iota {dimensions = array<i32: 1>} : vector<1x128xi32>
    %15 = vector.extract_strided_slice %2 {offsets = [0, 0], sizes = [1, 128], strides = [1, 1]} : vector<3x128xf32> to vector<1x128xf32>
    %16 = vector.extract_strided_slice %2 {offsets = [1, 0], sizes = [1, 128], strides = [1, 1]} : vector<3x128xf32> to vector<1x128xf32>
    %17 = vector.broadcast %13 : f32 to vector<1x128xf32>
    %18 = arith.subf %17, %15 : vector<1x128xf32>
    %cst_8 = arith.constant 1.000000e-01 : f32
    %19 = vector.broadcast %cst_8 : f32 to vector<1x128xf32>
    %20 = arith.mulf %19, %18 : vector<1x128xf32>
    %21 = arith.negf %20 : vector<1x128xf32>
    %22 = math.exp %21 : vector<1x128xf32>
    %cst_9 = arith.constant 1.000000e+00 : f32
    %23 = vector.broadcast %cst_9 : f32 to vector<1x128xf32>
    %24 = arith.addf %23, %22 : vector<1x128xf32>
    %25 = arith.divf %23, %24 : vector<1x128xf32>
    %26 = vector.broadcast %13 : f32 to vector<1x128xf32>
    %27 = arith.subf %16, %26 : vector<1x128xf32>
    %cst_10 = arith.constant 1.000000e-01 : f32
    %28 = vector.broadcast %cst_10 : f32 to vector<1x128xf32>
    %29 = arith.mulf %28, %27 : vector<1x128xf32>
    %30 = arith.negf %29 : vector<1x128xf32>
    %31 = math.exp %30 : vector<1x128xf32>
    %cst_11 = arith.constant 1.000000e+00 : f32
    %32 = vector.broadcast %cst_11 : f32 to vector<1x128xf32>
    %33 = arith.addf %32, %31 : vector<1x128xf32>
    %34 = arith.divf %32, %33 : vector<1x128xf32>
    %c8_i32 = arith.constant 8 : i32
    %35 = vector.broadcast %c8_i32 : i32 to vector<1x128xi32>
    %36 = arith.cmpi slt, %14, %35 : vector<1x128xi32>
    %cst_12 = arith.constant 0.000000e+00 : f32
    %37 = vector.broadcast %cst_12 : f32 to vector<1x128xf32>
    %38 = arith.select %36, %25, %37 : vector<1x128xi1>, vector<1x128xf32>
    %39 = vector.shape_cast %38 : vector<1x128xf32> to vector<1x1x128xf32>
    %cst_13 = arith.constant dense<0.000000e+00> : vector<1xf32>
    %40 = vector.multi_reduction <add>, %39, %cst_13 [1, 2] : vector<1x1x128xf32> to vector<1xf32>
    %41 = vector.shape_cast %40 : vector<1xf32> to vector<1x1x1xf32>
    %42 = vector.extract %41[0, 0, 0] : f32 from vector<1x1x1xf32>
    %c6_i32 = arith.constant 6 : i32
    %43 = vector.broadcast %c6_i32 : i32 to vector<1x128xi32>
    %44 = arith.cmpi slt, %14, %43 : vector<1x128xi32>
    %cst_14 = arith.constant 0.000000e+00 : f32
    %45 = vector.broadcast %cst_14 : f32 to vector<1x128xf32>
    %46 = arith.select %44, %34, %45 : vector<1x128xi1>, vector<1x128xf32>
    %47 = vector.shape_cast %46 : vector<1x128xf32> to vector<1x1x128xf32>
    %cst_15 = arith.constant dense<0.000000e+00> : vector<1xf32>
    %48 = vector.multi_reduction <add>, %47, %cst_15 [1, 2] : vector<1x1x128xf32> to vector<1xf32>
    %49 = vector.shape_cast %48 : vector<1xf32> to vector<1x1x1xf32>
    %50 = vector.extract %49[0, 0, 0] : f32 from vector<1x1x1xf32>
    %cst_16 = arith.constant 1.000000e+00 : f32
    %51 = arith.mulf %cst_16, %42 : f32
    %cst_17 = arith.constant 1.000000e+00 : f32
    %52 = arith.mulf %cst_17, %50 : f32
    %53 = arith.addf %51, %52 : f32
    %cst_18 = arith.constant 1.400000e+01 : f32
    %54 = arith.divf %53, %cst_18 : f32
    %55 = tpu.iota {dimensions = array<i32: 1>} : vector<1x128xi32>
    %c0_i32 = arith.constant 0 : i32
    %56 = vector.broadcast %c0_i32 : i32 to vector<1x128xi32>
    %57 = arith.cmpi eq, %55, %56 : vector<1x128xi32>
    %c1_i32 = arith.constant 1 : i32
    %58 = vector.broadcast %c1_i32 : i32 to vector<1x128xi32>
    %59 = arith.cmpi eq, %55, %58 : vector<1x128xi32>
    %cst_19 = arith.constant 0.000000e+00 : f32
    %60 = vector.broadcast %13 : f32 to vector<1x128xf32>
    %61 = vector.broadcast %cst_19 : f32 to vector<1x128xf32>
    %62 = arith.select %59, %60, %61 : vector<1x128xi1>, vector<1x128xf32>
    %63 = vector.broadcast %54 : f32 to vector<1x128xf32>
    %64 = arith.select %57, %63, %62 : vector<1x128xi1>, vector<1x128xf32>
    %c0_20 = arith.constant 0 : index
    %c0_21 = arith.constant 0 : index
    %65 = vector.load %arg3[%c0_20, %c0_21] : memref<1x128xf32, #tpu.memory_space<vmem>>, vector<1x128xf32>
    tpu.vector_store %arg3[%c0_20, %c0_21], %64 {strides = array<i32>} : memref<1x128xf32, #tpu.memory_space<vmem>>, vector<1x128xf32>,
    return
  }
}

</mosaic_0001>

<llo_original>
// kernel: tpu_custom_call.1
$region0: #{tpu_custom_call.1}
  #allocation0 [shape = 'u32[]', space=smem, size = 0x4, offset = 0x4, fixed_abs, tag = 'smem constant byte address 0x4 - core index']
  #allocation1 [shape = 'u32[144,128]{1,0:T(1,128)}', space=vmem, size = 0x12000, scoped, tag = 'internal scratch']
  %s0 = inlined_call_operand.hbm [shape: f32[3,128], index: 0, kind: input, shape index: {}]
  %s1 = inlined_call_operand.hbm [shape: f32[3,128], index: 1, kind: input, shape index: {}]
  %s2 = inlined_call_operand.hbm [shape: f32[2,128], index: 2, kind: output, shape index: {0}]
  %s3 = inlined_call_operand.hbm [shape: f32[1,128], index: 3, kind: output, shape index: {1}]
  %4 = xla_tuple %s2, %s3
  %s5 = sld [smem:[#allocation0]]
  $region34: #{tpu_custom_call.1} parent=0
    _
  %s7 = ssub.s32 1, %s5
  %s8 = scalar_select 0, %s7, %s5
  $region1: #{tpu_custom_call.1} parent=0
    #allocation2 [shape = 'u8[2048]{0}', space=vmem, size = 0x800, scoped, tag = 'input window, operand 0, single buffered']
    #allocation3 [shape = 's32[1]{0}', space=sflag, size = 0x4, scoped, tag = 'scoped memory for tpu_custom_call.1']
    #allocation4 [shape = 's32[1]{0}', space=sflag, size = 0x4, scoped, tag = 'scoped memory for tpu_custom_call.1']
    #allocation5 [shape = 'u8[2048]{0}', space=vmem, size = 0x800, scoped, tag = 'input window, operand 1, single buffered']
    #allocation6 [shape = 's32[1]{0}', space=sflag, size = 0x4, scoped, tag = 'scoped memory for tpu_custom_call.1']
    #allocation7 [shape = 'u8[1024]{0}', space=vmem, size = 0x400, scoped, tag = 'output window, operand 0, single buffered']
    #allocation8 [shape = 'u8[512]{0}', space=vmem, size = 0x400, scoped, tag = 'output window, operand 1, single buffered']
    #allocation9 [shape = 's32[1]{0}', space=sflag, size = 0x4, scoped, tag = 'scoped memory for tpu_custom_call.1']
    %9 = vsyncpa [#allocation3], 0
    %10 = vsyncpa [#allocation6], 0
    %11 = vsyncpa [#allocation4], 0
    %12 = vsyncpa [#allocation9], 0
    // Predicated region
    $region2: #{tpu_custom_call.1} parent=1 // pred_check
      _
    $region3: #{tpu_custom_call.1} parent=1 // pred_check_branch
      %14 = sbr.rel (0) target = $region5
    $region4: #{tpu_custom_call.1} parent=1 // pred_region
      %s16 = ssub.s32 64, 64
      %17 = vsyncadd [#allocation3], %s16
      %s19 = sshll.u32 [#allocation2], 4
      %s20 = int_to_ptr.vmem [resolvable:$true] %s19
      %22 = dma.hbm_to_vmem [thread:$0]  %s0, 64, %s20, [#allocation3]
    $region5: #{tpu_custom_call.1} parent=1 // pred_fallthru
      _
    // Predicated region
    $region6: #{tpu_custom_call.1} parent=1 // pred_check
      _
    $region7: #{tpu_custom_call.1} parent=1 // pred_check_branch
      %24 = sbr.rel (0) target = $region9
    $region8: #{tpu_custom_call.1} parent=1 // pred_region
      %s26 = ssub.s32 64, 64
      %27 = vsyncadd [#allocation6], %s26
      %s29 = sshll.u32 [#allocation5], 4
      %s30 = int_to_ptr.vmem [resolvable:$true] %s29
      %32 = dma.hbm_to_vmem [thread:$0]  %s1, 64, %s30, [#allocation6]
    $region9: #{tpu_custom_call.1} parent=1 // pred_fallthru
      _
    // Predicated region
    $region10: #{tpu_custom_call.1} parent=1 // pred_check
      _
    $region11: #{tpu_custom_call.1} parent=1 // pred_check_branch
      %34 = sbr.rel (0) target = $region13
    $region12: #{tpu_custom_call.1} parent=1 // pred_region
      %35 = dma.done [#allocation3], 64
    $region13: #{tpu_custom_call.1} parent=1 // pred_fallthru
      _
    // Predicated region
    $region14: #{tpu_custom_call.1} parent=1 // pred_check
      _
    $region15: #{tpu_custom_call.1} parent=1 // pred_check_branch
      %37 = sbr.rel (0) target = $region17
    $region16: #{tpu_custom_call.1} parent=1 // pred_region
      %38 = dma.done [#allocation6], 64
    $region17: #{tpu_custom_call.1} parent=1 // pred_fallthru
      _
    %v39 = vld [vmem:[#allocation2] sm:$0x7]
    %v40 = vld [vmem:[#allocation5] sm:$0x7]
    %v41 = vsub.f32 %v39, %v40
    %v42 = vmul.f32 %v41, 0.1
    %43 = vst [vmem:[#allocation7] sm:$0x3] %v42
    %v45 = vrot.slane %v41, 2
    %vm47 = vcmask 1040384
    %v48 = vsel %vm47, %v45, 0.0
    %49 = vadd.xlane.f32.xlu0 %v48
    %v50 = vpop.xlane.xlu0 %49
    %v51 = vrot.slane %v50, 4
    %v52 = vadd.f32 %v50, %v51
    %v53 = vrot.slane %v52, 2
    %v54 = vadd.f32 %v52, %v53
    %v55 = vrot.slane %v54, 1
    %v56 = vadd.f32 %v54, %v55
    %s57 = vtos %v56
    %v58 = vrcp.pop 8.0
    %s59 = vtos %v58
    %s60 = smul.f32 %s57, %s59
    %s61 = smax.f32 %s60, 0.0
    %v62 = vlaneseq
    %v63 = vand.u32 %v62, 127
    %v64 = vstv %s61
    %v65 = vsub.f32 %v64, %v41
    %v66 = vmul.f32 %v65, 0.1
    %v67 = vxor.u32 %v66, 2147483648
    %v68 = vmul.f32 %v67, 1.442695
    %v69 = vpow.pop %v68
    %v70 = vadd.f32 %v69, 1.0
    %v71 = vrcp.pop %v70
    %v72 = vmul.f32 1.0, %v71
    %v73 = vsub.f32 %v41, %v64
    %v74 = vmul.f32 %v73, 0.1
    %v75 = vxor.u32 %v74, 2147483648
    %v76 = vmul.f32 %v75, 1.442695
    %v77 = vpow.pop %v76
    %v78 = vadd.f32 %v77, 1.0
    %v79 = vrcp.pop %v78
    %v80 = vmul.f32 1.0, %v79
    %vm81 = vcmp.lt.s32.totalorder %v63, 8
    %v82 = vsel %vm81, %v72, 0.0
    %v83 = vsel %vm47, %v82, 0.0
    %84 = vadd.xlane.f32.xlu0 %v83
    %v85 = vpop.xlane.xlu0 %84
    %v86 = vrot.slane %v85, 4
    %v87 = vadd.f32 %v85, %v86
    %v88 = vrot.slane %v87, 2
    %v89 = vadd.f32 %v87, %v88
    %v90 = vrot.slane %v89, 1
    %v91 = vadd.f32 %v89, %v90
    %s92 = vtos %v91
    %vm93 = vcmp.lt.s32.totalorder %v63, 6
    %v94 = vsel %vm93, %v80, 0.0
    %v96 = vrot.slane %v94, 1
    %v98 = vsel %vm47, %v96, 0.0
    %99 = vadd.xlane.f32.xlu0 %v98
    %v100 = vpop.xlane.xlu0 %99
    %v101 = vrot.slane %v100, 4
    %v102 = vadd.f32 %v100, %v101
    %v103 = vrot.slane %v102, 2
    %v104 = vadd.f32 %v102, %v103
    %v105 = vrot.slane %v104, 1
    %v106 = vadd.f32 %v104, %v105
    %s107 = vtos %v106
    %s108 = sadd.f32 %s92, %s107
    %v109 = vrcp.pop 14.0
    %s110 = vtos %v109
    %s111 = smul.f32 %s108, %s110
    %vm112 = vcmp.eq.s32.totalorder %v63, 0
    %vm113 = vcmp.eq.s32.totalorder %v63, 1
    %v114 = vsel %vm113, %v64, 0.0
    %v115 = vstv %s111
    %v116 = vsel %vm112, %v115, %v114
    %117 = vst [vmem:[#allocation8] sm:$0x1] %v116
    // Predicated region
    $region18: #{tpu_custom_call.1} parent=1 // pred_check
      _
    $region19: #{tpu_custom_call.1} parent=1 // pred_check_branch
      %119 = sbr.rel (0) target = $region21
    $region20: #{tpu_custom_call.1} parent=1 // pred_region
      %s121 = ssub.s32 32, 32
      %122 = vsyncadd [#allocation4], %s121
      %s124 = sshll.u32 [#allocation7], 4
      %s125 = int_to_ptr.vmem [resolvable:$true] %s124
      %127 = dma.vmem_to_hbm [thread:$0]  %s125, 32, %s2, [#allocation4]
    $region21: #{tpu_custom_call.1} parent=1 // pred_fallthru
      _
    // Predicated region
    $region22: #{tpu_custom_call.1} parent=1 // pred_check
      _
    $region23: #{tpu_custom_call.1} parent=1 // pred_check_branch
      %129 = sbr.rel (0) target = $region25
    $region24: #{tpu_custom_call.1} parent=1 // pred_region
      %s131 = ssub.s32 16, 16
      %132 = vsyncadd [#allocation9], %s131
      %s134 = sshll.u32 [#allocation8], 4
      %s135 = int_to_ptr.vmem [resolvable:$true] %s134
      %137 = dma.vmem_to_hbm [thread:$0]  %s135, 16, %s3, [#allocation9]
    $region25: #{tpu_custom_call.1} parent=1 // pred_fallthru
      _
    // Predicated region
    $region26: #{tpu_custom_call.1} parent=1 // pred_check
      _
    $region27: #{tpu_custom_call.1} parent=1 // pred_check_branch
      %139 = sbr.rel (0) target = $region29
    $region28: #{tpu_custom_call.1} parent=1 // pred_region
      %140 = dma.done [#allocation4], 32
    $region29: #{tpu_custom_call.1} parent=1 // pred_fallthru
      _
    // Predicated region
    $region30: #{tpu_custom_call.1} parent=1 // pred_check
      _
    $region31: #{tpu_custom_call.1} parent=1 // pred_check_branch
      %142 = sbr.rel (0) target = $region33
    $region32: #{tpu_custom_call.1} parent=1 // pred_region
      %143 = dma.done [#allocation9], 16
    $region33: #{tpu_custom_call.1} parent=1 // pred_fallthru
      _
    %144 = vsyncpa [#allocation3], 1
    %145 = vsyncpa [#allocation6], 1
    %146 = vsyncpa [#allocation4], 1
    %147 = vsyncpa [#allocation9], 1

</llo_original>
